<compile_context>
chip_gen: v5e
topology: v5e:2x2
jax: 0.10.0
libtpu: 0.0.40
codegen_flags: <defaults>
</compile_context>

<pallas_src>
import jax
import jax.numpy as jnp
from jax.experimental import pallas as pl
from jax.experimental.pallas import tpu as pltpu

J = 14               # joints  (backbone D=[56, ..., 42]  =>  4*J = 56, 3*J = 42)
DIN = 4 * J          # 56
DOUT = 3 * J         # 42
DOUT_PAD = 128       # lane-dense output width (sliced back to 42 in the wrapper)
HIDDEN = 256         # small stand-in for the 2048-wide production backbone
# For the real 2048-wide backbone: keep bf16 weights + constant index_maps and set
# pltpu.CompilerParams(vmem_limit_bytes=...) with headroom (v5e default 16 MiB /
# v7x 64 MiB physical both need explicit budgeting).


def _round_up(v, m):
    return ((v + m - 1) // m) * m


def _make_kernel(p, use_dropout):
    p = float(p)
    use_dropout = bool(use_dropout) and p > 0.0
    thr_int = min(int(round(p * 4294967296.0)), 4294967295)   # keep iff bits >= p*2^32
    keep_scale = 1.0 / (1.0 - p) if (use_dropout and p < 1.0) else 1.0

    def kernel(*refs):
        if use_dropout:
            (x_ref, csum_ref, binm_ref, sel_ref, bout_ref, xm_ref,
             w1_ref, b1_ref, w2_ref, b2_ref, w3_ref, b3_ref, w4_ref, b4_ref,
             bits1_ref, bits2_ref, bits3_ref, out_ref) = refs
            bits_refs = (bits1_ref, bits2_ref, bits3_ref)
        else:
            (x_ref, csum_ref, binm_ref, sel_ref, bout_ref, xm_ref,
             w1_ref, b1_ref, w2_ref, b2_ref, w3_ref, b3_ref, w4_ref, b4_ref,
             out_ref) = refs
            bits_refs = (None, None, None)

        x = x_ref[...]                                               # [TB, 56] f32

        # --- center: all four per-component sums in ONE tiny matmul ----------
        xc = jnp.dot(x, csum_ref[...], preferred_element_type=jnp.float32)   # [TB, 4]
        inv_sw = 1.0 / xc[:, 3:4]                                    # [TB, 1]
        c4 = xc * inv_sw                                             # [TB, 4] (c4[:,3]==1)

        # broadcast center to every xyz input column (0 at w columns)
        c_bcast = jnp.dot(c4, binm_ref[...], preferred_element_type=jnp.float32)  # [TB,56]
        # every column gets its own joint's homogeneous w component
        w_bcast = jnp.dot(x, sel_ref[...], preferred_element_type=jnp.float32)    # [TB,56]

        xm = xm_ref[...]                                             # [1, 56]: 1 at xyz, 0 at w
        pre = (x - c_bcast) * w_bcast
        h = xm * pre + (1.0 - xm) * x                                # preprocessed [TB, 56]

        def dense(v, w_ref, b_ref):
            # bf16 operands on the MXU, f32 accumulation, bias added in f32.
            y = jnp.dot(v.astype(jnp.bfloat16), w_ref[...],
                        preferred_element_type=jnp.float32)
            return y + b_ref[...]

        def dropout(v, bref):
            if not use_dropout:
                return v
            keep = bref[...] >= jnp.uint32(thr_int)                  # P(keep) = 1 - p
            return jnp.where(keep, v * keep_scale, 0.0)              # inverted dropout

        h = dropout(jnp.maximum(dense(h, w1_ref, b1_ref), 0.0), bits_refs[0])
        h = dropout(jnp.maximum(dense(h, w2_ref, b2_ref), 0.0), bits_refs[1])
        h = dropout(jnp.maximum(dense(h, w3_ref, b3_ref), 0.0), bits_refs[2])
        y = dense(h, w4_ref, b4_ref)                                 # [TB, 128] (cols >= 42 are 0)

        # add the per-coordinate center back onto every joint's prediction
        c_add = jnp.dot(c4, bout_ref[...], preferred_element_type=jnp.float32)    # [TB,128]
        out_ref[...] = y + c_add

    return kernel


def _const_mats():
    a = jnp.arange(DIN)
    ca = a % 4                                   # component index of each input column
    comp4 = jnp.arange(4)
    # csum[a, c] = 1 iff input column a holds component c   ->  x @ csum = per-component sums
    csum = (ca[:, None] == comp4[None, :]).astype(jnp.float32)                       # [56, 4]
    # binm[c, a] = 1 iff column a holds xyz component c (row 3 == w is all zero)
    binm = ((comp4[:, None] == ca[None, :]) & (comp4[:, None] < 3)).astype(jnp.float32)  # [4, 56]
    # sel[b, a] = 1 iff column b is the w column of column a's joint
    sel = ((ca[:, None] == 3) &
           ((a[:, None] // 4) == (a[None, :] // 4))).astype(jnp.float32)              # [56, 56]
    # bout[c, d] = 1 iff padded output column d (< DOUT) holds coordinate c
    d = jnp.arange(DOUT_PAD)
    bout = ((comp4[:, None] == (d[None, :] % 3)) &
            (comp4[:, None] < 3) &
            (d[None, :] < DOUT)).astype(jnp.float32)                                  # [4, 128]
    # xyz mask row: 1 at xyz columns, 0 at w columns
    xm = (ca < 3).astype(jnp.float32)[None, :]                                        # [1, 56]
    return csum, binm, sel, bout, xm


def init_params(key, dims=(DIN, HIDDEN, HIDDEN, HIDDEN, DOUT)):
    """Deterministic nn.Linear-style init: U(-1/sqrt(fan_in), 1/sqrt(fan_in))."""
    params = []
    for i in range(len(dims) - 1):
        key, k1, k2 = jax.random.split(key, 3)
        bound = 1.0 / (dims[i] ** 0.5)
        w = jax.random.uniform(k1, (dims[i], dims[i + 1]), jnp.float32, -bound, bound)
        b = jax.random.uniform(k2, (1, dims[i + 1]), jnp.float32, -bound, bound)
        params += [w, b]
    return params


def pose_completion_forward(x, params, *, p=0.5, dropout=True, rng_key=None, tb=512):
    """x: [n, s, j, 4] -> [n, s, j, 3]  (matches PoseCompletion.forward)."""
    n, s, j, four = x.shape
    assert four == 4 and j == J
    B = n * s
    TB = min(int(tb), _round_up(B, 8))          # batch tile (>= 8 sublanes)
    B_pad = _round_up(B, TB)

    x_flat = x.reshape(B, DIN).astype(jnp.float32)
    if B_pad > B:
        # pad with ones so sum(w) != 0 on the (discarded) padding rows
        x_flat = jnp.concatenate(
            [x_flat, jnp.ones((B_pad - B, DIN), jnp.float32)], axis=0)

    csum, binm, sel, bout, xm = _const_mats()

    w1, b1, w2, b2, w3, b3, w4, b4 = params
    H = w1.shape[1]
    # pad the final layer to a lane-dense 128-wide output
    w4p = jnp.zeros((w4.shape[0], DOUT_PAD), jnp.float32).at[:, :DOUT].set(w4)
    b4p = jnp.zeros((1, DOUT_PAD), jnp.float32).at[:, :DOUT].set(b4)
    weights = [w1.astype(jnp.bfloat16), b1.astype(jnp.float32),
               w2.astype(jnp.bfloat16), b2.astype(jnp.float32),
               w3.astype(jnp.bfloat16), b3.astype(jnp.float32),
               w4p.astype(jnp.bfloat16), b4p]

    use_dropout = bool(dropout) and float(p) > 0.0

    def const_spec(shape):                       # full-array block, VMEM-resident
        return pl.BlockSpec(shape, lambda i: (0, 0))

    inputs = [x_flat, csum, binm, sel, bout, xm, *weights]
    in_specs = [
        pl.BlockSpec((TB, DIN), lambda i: (i, 0)),      # x tiles over batch
        const_spec((DIN, 4)),                           # csum
        const_spec((4, DIN)),                           # binm
        const_spec((DIN, DIN)),                         # sel
        const_spec((4, DOUT_PAD)),                      # bout
        const_spec((1, DIN)),                           # xyz mask
        const_spec((DIN, H)), const_spec((1, H)),       # layer 1
        const_spec((H, H)), const_spec((1, H)),         # layer 2
        const_spec((H, H)), const_spec((1, H)),         # layer 3
        const_spec((H, DOUT_PAD)), const_spec((1, DOUT_PAD)),   # layer 4 (padded)
    ]

    if use_dropout:
        # TODO(synk): on real HW one could use in-kernel pltpu.prng_seed /
        # prng_random_bits (seeded per tile with pl.program_id) to avoid
        # materializing the dropout bits in HBM; host-generated uint32 bits are
        # used here so the kernel also runs under interpret mode.
        if rng_key is None:
            rng_key = jax.random.PRNGKey(0)
        bits = jax.random.bits(rng_key, (3, B_pad, H), dtype=jnp.uint32)
        inputs += [bits[0], bits[1], bits[2]]
        in_specs += [pl.BlockSpec((TB, H), lambda i: (i, 0))] * 3

    kernel = _make_kernel(p, use_dropout)
    out = pl.pallas_call(
        kernel,
        out_shape=jax.ShapeDtypeStruct((B_pad, DOUT_PAD), jnp.float32),
        grid=(B_pad // TB,),
        in_specs=in_specs,
        out_specs=pl.BlockSpec((TB, DOUT_PAD), lambda i: (i, 0)),
        compiler_params=pltpu.CompilerParams(
            dimension_semantics=("parallel",)),     # v7x: shard batch tiles across both TCs
    )(*inputs)
    return out[:B, :DOUT].reshape(n, s, J, 3)


def reference_forward(x, params):
    """Pure-JAX f32 reference of the PyTorch forward (dropout disabled)."""
    n, s, j, _ = x.shape
    xf = x.reshape(n * s, j, 4)
    c = xf.sum(axis=1)
    c = c / c[:, 3:4]
    xyz = (xf[..., :3] - c[:, None, :3]) * xf[..., 3:4]
    h = jnp.concatenate([xyz, xf[..., 3:4]], axis=-1).reshape(n * s, -1)
    w1, b1, w2, b2, w3, b3, w4, b4 = params
    h = jnp.maximum(h @ w1 + b1, 0.0)
    h = jnp.maximum(h @ w2 + b2, 0.0)
    h = jnp.maximum(h @ w3 + b3, 0.0)
    y = h @ w4 + b4
    return y.reshape(n, s, j, 3) + c.reshape(n, s, 1, 4)[..., :3]


if __name__ == "__main__":
    key = jax.random.PRNGKey(0)
    kx, kw, kp, kd = jax.random.split(key, 4)

    n, s = 2, 8
    xyz = jax.random.normal(kx, (n, s, J, 3), jnp.float32)
    wcomp = jax.random.uniform(kw, (n, s, J, 1), jnp.float32, 0.5, 1.5)
    x = jnp.concatenate([xyz, wcomp], axis=-1)                 # [n, s, j, 4]
    params = init_params(kp)

    # deterministic path (dropout off) — check against pure-JAX f32 reference
    out_nodrop = jax.block_until_ready(
        pose_completion_forward(x, params, p=0.5, dropout=False))
    ref = jax.block_until_ready(reference_forward(x, params))
    assert out_nodrop.shape == (n, s, J, 3)
    err = float(jnp.max(jnp.abs(out_nodrop - ref)))
    scale = float(jnp.max(jnp.abs(ref))) + 1.0
    assert err <= 0.05 * scale, f"kernel/reference mismatch: {err} (scale {scale})"

    # training path (dropout on, host-generated uint32 bits, in-kernel inverted dropout)
    out_drop = jax.block_until_ready(
        pose_completion_forward(x, params, p=0.5, dropout=True, rng_key=kd))
    assert out_drop.shape == (n, s, J, 3)
    assert bool(jnp.all(jnp.isfinite(out_drop)))

    print("KERNEL_OK")
</pallas_src>

<mosaic_0001>
module attributes {stable_mosaic.version = 11 : i64} {
  func.func @kernel(%arg0: i32, %arg1: memref<16x56xf32, #tpu.memory_space<vmem>>, %arg2: memref<56x4xf32, #tpu.memory_space<vmem>>, %arg3: memref<4x56xf32, #tpu.memory_space<vmem>>, %arg4: memref<56x56xf32, #tpu.memory_space<vmem>>, %arg5: memref<4x128xf32, #tpu.memory_space<vmem>>, %arg6: memref<1x56xf32, #tpu.memory_space<vmem>>, %arg7: memref<56x256xbf16, #tpu.memory_space<vmem>>, %arg8: memref<1x256xf32, #tpu.memory_space<vmem>>, %arg9: memref<256x256xbf16, #tpu.memory_space<vmem>>, %arg10: memref<1x256xf32, #tpu.memory_space<vmem>>, %arg11: memref<256x256xbf16, #tpu.memory_space<vmem>>, %arg12: memref<1x256xf32, #tpu.memory_space<vmem>>, %arg13: memref<256x128xbf16, #tpu.memory_space<vmem>>, %arg14: memref<1x128xf32, #tpu.memory_space<vmem>>, %arg15: memref<16x128xf32, #tpu.memory_space<vmem>>) attributes {dimension_semantics = [#tpu.dimension_semantics<parallel>], iteration_bounds = array<i64: 1>, scalar_prefetch = 0 : i64, scratch_operands = 0 : i64, tpu.core_type = #tpu.core_type<tc>, window_params = [{transform_indices = @transform_0, window_bounds = array<i64: 16, 56>}, {pipeline_mode = #tpu.pipeline_mode<synchronous>, transform_indices = @transform_1, window_bounds = array<i64: 56, 4>}, {pipeline_mode = #tpu.pipeline_mode<synchronous>, transform_indices = @transform_2, window_bounds = array<i64: 4, 56>}, {pipeline_mode = #tpu.pipeline_mode<synchronous>, transform_indices = @transform_3, window_bounds = array<i64: 56, 56>}, {pipeline_mode = #tpu.pipeline_mode<synchronous>, transform_indices = @transform_4, window_bounds = array<i64: 4, 128>}, {pipeline_mode = #tpu.pipeline_mode<synchronous>, transform_indices = @transform_5, window_bounds = array<i64: 1, 56>}, {pipeline_mode = #tpu.pipeline_mode<synchronous>, transform_indices = @transform_6, window_bounds = array<i64: 56, 256>}, {pipeline_mode = #tpu.pipeline_mode<synchronous>, transform_indices = @transform_7, window_bounds = array<i64: 1, 256>}, {pipeline_mode = #tpu.pipeline_mode<synchronous>, transform_indices = @transform_8, window_bounds = array<i64: 256, 256>}, {pipeline_mode = #tpu.pipeline_mode<synchronous>, transform_indices = @transform_9, window_bounds = array<i64: 1, 256>}, {pipeline_mode = #tpu.pipeline_mode<synchronous>, transform_indices = @transform_10, window_bounds = array<i64: 256, 256>}, {pipeline_mode = #tpu.pipeline_mode<synchronous>, transform_indices = @transform_11, window_bounds = array<i64: 1, 256>}, {pipeline_mode = #tpu.pipeline_mode<synchronous>, transform_indices = @transform_12, window_bounds = array<i64: 256, 128>}, {pipeline_mode = #tpu.pipeline_mode<synchronous>, transform_indices = @transform_13, window_bounds = array<i64: 1, 128>}, {transform_indices = @transform_14, window_bounds = array<i64: 16, 128>}]} {
    %c0 = arith.constant 0 : index
    %c0_0 = arith.constant 0 : index
    %0 = vector.load %arg1[%c0, %c0_0] : memref<16x56xf32, #tpu.memory_space<vmem>>, vector<16x56xf32>
    %c0_1 = arith.constant 0 : index
    %c0_2 = arith.constant 0 : index
    %1 = vector.load %arg2[%c0_1, %c0_2] : memref<56x4xf32, #tpu.memory_space<vmem>>, vector<56x4xf32>
    %cst = arith.constant dense<0.000000e+00> : vector<16x4xf32>
    %2 = tpu.matmul %0, %1, %cst {dimension_numbers = #tpu.dot_dimension_numbers<[1], [0], [0], [1], [0, 0, 1, 1], [], []>} : vector<16x56xf32>, vector<56x4xf32>, vector<16x4xf32> -> vector<16x4xf32>
    %3 = vector.extract_strided_slice %2 {offsets = [0, 3], sizes = [16, 1], strides = [1, 1]} : vector<16x4xf32> to vector<16x1xf32>
    %cst_3 = arith.constant 1.000000e+00 : f32
    %4 = vector.broadcast %cst_3 : f32 to vector<16x1xf32>
    %5 = arith.divf %4, %3 : vector<16x1xf32>
    %6 = vector.broadcast %5 : vector<16x1xf32> to vector<16x4xf32>
    %7 = arith.mulf %2, %6 : vector<16x4xf32>
    %c0_4 = arith.constant 0 : index
    %c0_5 = arith.constant 0 : index
    %8 = vector.load %arg3[%c0_4, %c0_5] : memref<4x56xf32, #tpu.memory_space<vmem>>, vector<4x56xf32>
    %cst_6 = arith.constant dense<0.000000e+00> : vector<16x56xf32>
    %9 = tpu.matmul %7, %8, %cst_6 {dimension_numbers = #tpu.dot_dimension_numbers<[1], [0], [0], [1], [0, 0, 1, 1], [], []>} : vector<16x4xf32>, vector<4x56xf32>, vector<16x56xf32> -> vector<16x56xf32>
    %c0_7 = arith.constant 0 : index
    %c0_8 = arith.constant 0 : index
    %10 = vector.load %arg4[%c0_7, %c0_8] : memref<56x56xf32, #tpu.memory_space<vmem>>, vector<56x56xf32>
    %cst_9 = arith.constant dense<0.000000e+00> : vector<16x56xf32>
    %11 = tpu.matmul %0, %10, %cst_9 {dimension_numbers = #tpu.dot_dimension_numbers<[1], [0], [0], [1], [0, 0, 1, 1], [], []>} : vector<16x56xf32>, vector<56x56xf32>, vector<16x56xf32> -> vector<16x56xf32>
    %c0_10 = arith.constant 0 : index
    %c0_11 = arith.constant 0 : index
    %12 = vector.load %arg6[%c0_10, %c0_11] : memref<1x56xf32, #tpu.memory_space<vmem>>, vector<1x56xf32>
    %13 = arith.subf %0, %9 : vector<16x56xf32>
    %14 = arith.mulf %13, %11 : vector<16x56xf32>
    %15 = vector.broadcast %12 : vector<1x56xf32> to vector<16x56xf32>
    %16 = arith.mulf %15, %14 : vector<16x56xf32>
    %cst_12 = arith.constant 1.000000e+00 : f32
    %17 = vector.broadcast %cst_12 : f32 to vector<1x56xf32>
    %18 = arith.subf %17, %12 : vector<1x56xf32>
    %19 = vector.broadcast %18 : vector<1x56xf32> to vector<16x56xf32>
    %20 = arith.mulf %19, %0 : vector<16x56xf32>
    %21 = arith.addf %16, %20 : vector<16x56xf32>
    %22 = arith.truncf %21 : vector<16x56xf32> to vector<16x56xbf16>
    %c0_13 = arith.constant 0 : index
    %c0_14 = arith.constant 0 : index
    %23 = vector.load %arg7[%c0_13, %c0_14] : memref<56x256xbf16, #tpu.memory_space<vmem>>, vector<56x256xbf16>
    %cst_15 = arith.constant dense<0.000000e+00> : vector<16x256xf32>
    %24 = tpu.matmul %22, %23, %cst_15 {dimension_numbers = #tpu.dot_dimension_numbers<[1], [0], [0], [1], [0, 0, 1, 1], [], []>} : vector<16x56xbf16>, vector<56x256xbf16>, vector<16x256xf32> -> vector<16x256xf32>
    %c0_16 = arith.constant 0 : index
    %c0_17 = arith.constant 0 : index
    %25 = vector.load %arg8[%c0_16, %c0_17] : memref<1x256xf32, #tpu.memory_space<vmem>>, vector<1x256xf32>
    %26 = vector.broadcast %25 : vector<1x256xf32> to vector<16x256xf32>
    %27 = arith.addf %24, %26 : vector<16x256xf32>
    %cst_18 = arith.constant 0.000000e+00 : f32
    %28 = vector.broadcast %cst_18 : f32 to vector<16x256xf32>
    %29 = arith.maximumf %27, %28 : vector<16x256xf32>
    %30 = arith.truncf %29 : vector<16x256xf32> to vector<16x256xbf16>
    %c0_19 = arith.constant 0 : index
    %c0_20 = arith.constant 0 : index
    %31 = vector.load %arg9[%c0_19, %c0_20] : memref<256x256xbf16, #tpu.memory_space<vmem>>, vector<256x256xbf16>
    %cst_21 = arith.constant dense<0.000000e+00> : vector<16x256xf32>
    %32 = tpu.matmul %30, %31, %cst_21 {dimension_numbers = #tpu.dot_dimension_numbers<[1], [0], [0], [1], [0, 0, 1, 1], [], []>} : vector<16x256xbf16>, vector<256x256xbf16>, vector<16x256xf32> -> vector<16x256xf32>
    %c0_22 = arith.constant 0 : index
    %c0_23 = arith.constant 0 : index
    %33 = vector.load %arg10[%c0_22, %c0_23] : memref<1x256xf32, #tpu.memory_space<vmem>>, vector<1x256xf32>
    %34 = vector.broadcast %33 : vector<1x256xf32> to vector<16x256xf32>
    %35 = arith.addf %32, %34 : vector<16x256xf32>
    %cst_24 = arith.constant 0.000000e+00 : f32
    %36 = vector.broadcast %cst_24 : f32 to vector<16x256xf32>
    %37 = arith.maximumf %35, %36 : vector<16x256xf32>
    %38 = arith.truncf %37 : vector<16x256xf32> to vector<16x256xbf16>
    %c0_25 = arith.constant 0 : index
    %c0_26 = arith.constant 0 : index
    %39 = vector.load %arg11[%c0_25, %c0_26] : memref<256x256xbf16, #tpu.memory_space<vmem>>, vector<256x256xbf16>
    %cst_27 = arith.constant dense<0.000000e+00> : vector<16x256xf32>
    %40 = tpu.matmul %38, %39, %cst_27 {dimension_numbers = #tpu.dot_dimension_numbers<[1], [0], [0], [1], [0, 0, 1, 1], [], []>} : vector<16x256xbf16>, vector<256x256xbf16>, vector<16x256xf32> -> vector<16x256xf32>
    %c0_28 = arith.constant 0 : index
    %c0_29 = arith.constant 0 : index
    %41 = vector.load %arg12[%c0_28, %c0_29] : memref<1x256xf32, #tpu.memory_space<vmem>>, vector<1x256xf32>
    %42 = vector.broadcast %41 : vector<1x256xf32> to vector<16x256xf32>
    %43 = arith.addf %40, %42 : vector<16x256xf32>
    %cst_30 = arith.constant 0.000000e+00 : f32
    %44 = vector.broadcast %cst_30 : f32 to vector<16x256xf32>
    %45 = arith.maximumf %43, %44 : vector<16x256xf32>
    %46 = arith.truncf %45 : vector<16x256xf32> to vector<16x256xbf16>
    %c0_31 = arith.constant 0 : index
    %c0_32 = arith.constant 0 : index
    %47 = vector.load %arg13[%c0_31, %c0_32] : memref<256x128xbf16, #tpu.memory_space<vmem>>, vector<256x128xbf16>
    %cst_33 = arith.constant dense<0.000000e+00> : vector<16x128xf32>
    %48 = tpu.matmul %46, %47, %cst_33 {dimension_numbers = #tpu.dot_dimension_numbers<[1], [0], [0], [1], [0, 0, 1, 1], [], []>} : vector<16x256xbf16>, vector<256x128xbf16>, vector<16x128xf32> -> vector<16x128xf32>
    %c0_34 = arith.constant 0 : index
    %c0_35 = arith.constant 0 : index
    %49 = vector.load %arg14[%c0_34, %c0_35] : memref<1x128xf32, #tpu.memory_space<vmem>>, vector<1x128xf32>
    %50 = vector.broadcast %49 : vector<1x128xf32> to vector<16x128xf32>
    %51 = arith.addf %48, %50 : vector<16x128xf32>
    %c0_36 = arith.constant 0 : index
    %c0_37 = arith.constant 0 : index
    %52 = vector.load %arg5[%c0_36, %c0_37] : memref<4x128xf32, #tpu.memory_space<vmem>>, vector<4x128xf32>
    %cst_38 = arith.constant dense<0.000000e+00> : vector<16x128xf32>
    %53 = tpu.matmul %7, %52, %cst_38 {dimension_numbers = #tpu.dot_dimension_numbers<[1], [0], [0], [1], [0, 0, 1, 1], [], []>} : vector<16x4xf32>, vector<4x128xf32>, vector<16x128xf32> -> vector<16x128xf32>
    %54 = arith.addf %51, %53 : vector<16x128xf32>
    %c0_39 = arith.constant 0 : index
    %c0_40 = arith.constant 0 : index
    %55 = vector.load %arg15[%c0_39, %c0_40] : memref<16x128xf32, #tpu.memory_space<vmem>>, vector<16x128xf32>
    tpu.vector_store %arg15[%c0_39, %c0_40], %54 {strides = array<i32>} : memref<16x128xf32, #tpu.memory_space<vmem>>, vector<16x128xf32>,
    return
  }
  func.func @transform_0(%arg0: i32) -> (i32, i32) {
    %c0_i32 = arith.constant 0 : i32
    %c0_i32_0 = arith.constant 0 : i32
    return %arg0, %c0_i32 : i32, i32
  }
  func.func @transform_1(%arg0: i32) -> (i32, i32) {
    %c0_i32 = arith.constant 0 : i32
    %c0_i32_0 = arith.constant 0 : i32
    %c0_i32_1 = arith.constant 0 : i32
    return %c0_i32, %c0_i32_0 : i32, i32
  }
  func.func @transform_2(%arg0: i32) -> (i32, i32) {
    %c0_i32 = arith.constant 0 : i32
    %c0_i32_0 = arith.constant 0 : i32
    %c0_i32_1 = arith.constant 0 : i32
    return %c0_i32, %c0_i32_0 : i32, i32
  }
  func.func @transform_3(%arg0: i32) -> (i32, i32) {
    %c0_i32 = arith.constant 0 : i32
    %c0_i32_0 = arith.constant 0 : i32
    %c0_i32_1 = arith.constant 0 : i32
    return %c0_i32, %c0_i32_0 : i32, i32
  }
  func.func @transform_4(%arg0: i32) -> (i32, i32) {
    %c0_i32 = arith.constant 0 : i32
    %c0_i32_0 = arith.constant 0 : i32
    %c0_i32_1 = arith.constant 0 : i32
    return %c0_i32, %c0_i32_0 : i32, i32
  }
  func.func @transform_5(%arg0: i32) -> (i32, i32) {
    %c0_i32 = arith.constant 0 : i32
    %c0_i32_0 = arith.constant 0 : i32
    %c0_i32_1 = arith.constant 0 : i32
    return %c0_i32, %c0_i32_0 : i32, i32
  }
  func.func @transform_6(%arg0: i32) -> (i32, i32) {
    %c0_i32 = arith.constant 0 : i32
    %c0_i32_0 = arith.constant 0 : i32
    %c0_i32_1 = arith.constant 0 : i32
    return %c0_i32, %c0_i32_0 : i32, i32
  }
  func.func @transform_7(%arg0: i32) -> (i32, i32) {
    %c0_i32 = arith.constant 0 : i32
    %c0_i32_0 = arith.constant 0 : i32
    %c0_i32_1 = arith.constant 0 : i32
    return %c0_i32, %c0_i32_0 : i32, i32
  }
  func.func @transform_8(%arg0: i32) -> (i32, i32) {
    %c0_i32 = arith.constant 0 : i32
    %c0_i32_0 = arith.constant 0 : i32
    %c0_i32_1 = arith.constant 0 : i32
    return %c0_i32, %c0_i32_0 : i32, i32
  }
  func.func @transform_9(%arg0: i32) -> (i32, i32) {
    %c0_i32 = arith.constant 0 : i32
    %c0_i32_0 = arith.constant 0 : i32
    %c0_i32_1 = arith.constant 0 : i32
    return %c0_i32, %c0_i32_0 : i32, i32
  }
  func.func @transform_10(%arg0: i32) -> (i32, i32) {
    %c0_i32 = arith.constant 0 : i32
    %c0_i32_0 = arith.constant 0 : i32
    %c0_i32_1 = arith.constant 0 : i32
    return %c0_i32, %c0_i32_0 : i32, i32
  }
  func.func @transform_11(%arg0: i32) -> (i32, i32) {
    %c0_i32 = arith.constant 0 : i32
    %c0_i32_0 = arith.constant 0 : i32
    %c0_i32_1 = arith.constant 0 : i32
    return %c0_i32, %c0_i32_0 : i32, i32
  }
  func.func @transform_12(%arg0: i32) -> (i32, i32) {
    %c0_i32 = arith.constant 0 : i32
    %c0_i32_0 = arith.constant 0 : i32
    %c0_i32_1 = arith.constant 0 : i32
    return %c0_i32, %c0_i32_0 : i32, i32
  }
  func.func @transform_13(%arg0: i32) -> (i32, i32) {
    %c0_i32 = arith.constant 0 : i32
    %c0_i32_0 = arith.constant 0 : i32
    %c0_i32_1 = arith.constant 0 : i32
    return %c0_i32, %c0_i32_0 : i32, i32
  }
  func.func @transform_14(%arg0: i32) -> (i32, i32) {
    %c0_i32 = arith.constant 0 : i32
    %c0_i32_0 = arith.constant 0 : i32
    return %arg0, %c0_i32 : i32, i32
  }
}

</mosaic_0001>

<llo_original>
// kernel: tpu_custom_call.1
$region0: #{tpu_custom_call.1}
  #allocation0 [shape = 'u32[]', space=smem, size = 0x4, offset = 0x4, fixed_abs, tag = 'smem constant byte address 0x4 - core index']
  #allocation1 [shape = 'u32[72,128]{1,0:T(1,128)}', space=vmem, size = 0x9000, scoped, tag = 'internal scratch']
  %s0 = inlined_call_operand.hbm [shape: f32[16,56], index: 0, kind: input, shape index: {}]
  %s1 = inlined_call_operand.vmem [shape: f32[56,4], index: 1, kind: input, shape index: {}]
  %s2 = inlined_call_operand.vmem [shape: f32[4,56], index: 2, kind: input, shape index: {}]
  %s3 = inlined_call_operand.vmem [shape: f32[56,56], index: 3, kind: input, shape index: {}]
  %s4 = inlined_call_operand.hbm [shape: f32[4,128], index: 4, kind: input, shape index: {}]
  %s5 = inlined_call_operand.hbm [shape: f32[1,56], index: 5, kind: input, shape index: {}]
  %s6 = inlined_call_operand.hbm [shape: bf16[56,256], index: 6, kind: input, shape index: {}]
  %s7 = inlined_call_operand.vmem [shape: f32[1,256], index: 7, kind: input, shape index: {}]
  %s8 = inlined_call_operand.hbm [shape: bf16[256,256], index: 8, kind: input, shape index: {}]
  %s9 = inlined_call_operand.vmem [shape: f32[1,256], index: 9, kind: input, shape index: {}]
  %s10 = inlined_call_operand.hbm [shape: bf16[256,256], index: 10, kind: input, shape index: {}]
  %s11 = inlined_call_operand.vmem [shape: f32[1,256], index: 11, kind: input, shape index: {}]
  %s12 = inlined_call_operand.hbm [shape: bf16[256,128], index: 12, kind: input, shape index: {}]
  %s13 = inlined_call_operand.vmem [shape: f32[1,128], index: 13, kind: input, shape index: {}]
  %s14 = inlined_call_operand.hbm [shape: f32[16,128], index: 14, kind: output, shape index: {}]
  %s15 = sld [smem:[#allocation0]]
  $region94: #{tpu_custom_call.1} parent=0
    _
  %s17 = ssub.s32 1, %s15
  %s18 = scalar_select 0, %s17, %s15
  $region1: #{tpu_custom_call.1} parent=0
    #allocation2 [shape = 'u8[8192]{0}', space=vmem, size = 0x2000, scoped, tag = 'input window, operand 0, single buffered']
    #allocation3 [shape = 's32[1]{0}', space=sflag, size = 0x4, scoped, tag = 'scoped memory for tpu_custom_call.1']
    #allocation4 [shape = 's32[1]{0}', space=sflag, size = 0x4, scoped, tag = 'scoped memory for tpu_custom_call.1']
    #allocation5 [shape = 'u8[2048]{0}', space=vmem, size = 0x800, scoped, tag = 'input window, operand 4, single buffered']
    #allocation6 [shape = 's32[1]{0}', space=sflag, size = 0x4, scoped, tag = 'scoped memory for tpu_custom_call.1']
    #allocation7 [shape = 'u8[512]{0}', space=vmem, size = 0x400, scoped, tag = 'input window, operand 5, single buffered']
    #allocation8 [shape = 'u8[28672]{0}', space=vmem, size = 0x7000, scoped, tag = 'input window, operand 6, single buffered']
    #allocation9 [shape = 's32[1]{0}', space=sflag, size = 0x4, scoped, tag = 'scoped memory for tpu_custom_call.1']
    #allocation10 [shape = 'u8[131072]{0}', space=vmem, size = 0x20000, scoped, tag = 'input window, operand 8, single buffered']
    #allocation11 [shape = 'u8[131072]{0}', space=vmem, size = 0x20000, scoped, tag = 'input window, operand 10, single buffered']
    #allocation12 [shape = 's32[1]{0}', space=sflag, size = 0x4, scoped, tag = 'scoped memory for tpu_custom_call.1']
    #allocation13 [shape = 'u8[65536]{0}', space=vmem, size = 0x10000, scoped, tag = 'input window, operand 12, single buffered']
    #allocation14 [shape = 'u8[8192]{0}', space=vmem, size = 0x2000, scoped, tag = 'output window, operand 0, single buffered']
    %19 = vsyncpa [#allocation3], 0
    %20 = vsyncpa [#allocation6], 0
    %21 = vsyncpa [#allocation9], 0
    %22 = vsyncpa [#allocation12], 0
    %23 = vsyncpa [#allocation4], 0
    // Predicated region
    $region2: #{tpu_custom_call.1} parent=1 // pred_check
      _
    $region3: #{tpu_custom_call.1} parent=1 // pred_check_branch
      %25 = sbr.rel (0) target = $region5
    $region4: #{tpu_custom_call.1} parent=1 // pred_region
      %27 = vsyncadd [#allocation3], 0
      %s28 = sshll.u32 %s0, 4
      %s29 = int_to_ptr.hbm [resolvable:$true] %s28
      %s30 = sshll.u32 [#allocation2], 4
      %s31 = int_to_ptr.vmem [resolvable:$true] %s30
      %36 = dma.hbm_to_vmem [thread:$0]  %s29, 256, %s31, [#allocation3], 128, 128, 8
    $region5: #{tpu_custom_call.1} parent=1 // pred_fallthru
      _
    // Predicated region
    $region6: #{tpu_custom_call.1} parent=1 // pred_check
      _
    $region7: #{tpu_custom_call.1} parent=1 // pred_check_branch
      %38 = sbr.rel (0) target = $region9
    $region8: #{tpu_custom_call.1} parent=1 // pred_region
      _
    $region9: #{tpu_custom_call.1} parent=1 // pred_fallthru
      _
    // Predicated region
    $region10: #{tpu_custom_call.1} parent=1 // pred_check
      _
    $region11: #{tpu_custom_call.1} parent=1 // pred_check_branch
      %40 = sbr.rel (0) target = $region13
    $region12: #{tpu_custom_call.1} parent=1 // pred_region
      _
    $region13: #{tpu_custom_call.1} parent=1 // pred_fallthru
      _
    // Predicated region
    $region14: #{tpu_custom_call.1} parent=1 // pred_check
      _
    $region15: #{tpu_custom_call.1} parent=1 // pred_check_branch
      %42 = sbr.rel (0) target = $region17
    $region16: #{tpu_custom_call.1} parent=1 // pred_region
      _
    $region17: #{tpu_custom_call.1} parent=1 // pred_fallthru
      _
    // Predicated region
    $region18: #{tpu_custom_call.1} parent=1 // pred_check
      _
    $region19: #{tpu_custom_call.1} parent=1 // pred_check_branch
      %44 = sbr.rel (0) target = $region21
    $region20: #{tpu_custom_call.1} parent=1 // pred_region
      %46 = vsyncadd [#allocation6], 0
      %s48 = sshll.u32 %s4, 4
      %s49 = int_to_ptr.hbm [resolvable:$true] %s48
      %s50 = sshll.u32 [#allocation5], 4
      %s51 = int_to_ptr.vmem [resolvable:$true] %s50
      %53 = dma.hbm_to_vmem [thread:$0]  %s49, 64, %s51, [#allocation6]
    $region21: #{tpu_custom_call.1} parent=1 // pred_fallthru
      _
    // Predicated region
    $region22: #{tpu_custom_call.1} parent=1 // pred_check
      _
    $region23: #{tpu_custom_call.1} parent=1 // pred_check_branch
      %55 = sbr.rel (0) target = $region25
    $region24: #{tpu_custom_call.1} parent=1 // pred_region
      %57 = vsyncadd [#allocation6], 0
      %s59 = sshll.u32 %s5, 4
      %s60 = int_to_ptr.hbm [resolvable:$true] %s59
      %s61 = sshll.u32 [#allocation7], 4
      %s62 = int_to_ptr.vmem [resolvable:$true] %s61
      %64 = dma.hbm_to_vmem [thread:$0]  %s60, 16, %s62, [#allocation6]
    $region25: #{tpu_custom_call.1} parent=1 // pred_fallthru
      _
    // Predicated region
    $region26: #{tpu_custom_call.1} parent=1 // pred_check
      _
    $region27: #{tpu_custom_call.1} parent=1 // pred_check_branch
      %66 = sbr.rel (0) target = $region29
    $region28: #{tpu_custom_call.1} parent=1 // pred_region
      %68 = vsyncadd [#allocation9], 0
      %s69 = sshll.u32 %s6, 4
      %s70 = int_to_ptr.hbm [resolvable:$true] %s69
      %s71 = sshll.u32 [#allocation8], 4
      %s72 = int_to_ptr.vmem [resolvable:$true] %s71
      %77 = dma.hbm_to_vmem [thread:$0]  %s70, 896, %s72, [#allocation9], 128, 128, 8
    $region29: #{tpu_custom_call.1} parent=1 // pred_fallthru
      _
    // Predicated region
    $region30: #{tpu_custom_call.1} parent=1 // pred_check
      _
    $region31: #{tpu_custom_call.1} parent=1 // pred_check_branch
      %79 = sbr.rel (0) target = $region33
    $region32: #{tpu_custom_call.1} parent=1 // pred_region
      _
    $region33: #{tpu_custom_call.1} parent=1 // pred_fallthru
      _
    // Predicated region
    $region34: #{tpu_custom_call.1} parent=1 // pred_check
      _
    $region35: #{tpu_custom_call.1} parent=1 // pred_check_branch
      %81 = sbr.rel (0) target = $region37
    $region36: #{tpu_custom_call.1} parent=1 // pred_region
      %83 = vsyncadd [#allocation9], 0
      %s84 = sshll.u32 %s8, 4
      %s85 = int_to_ptr.hbm [resolvable:$true] %s84
      %s86 = sshll.u32 [#allocation10], 4
      %s87 = int_to_ptr.vmem [resolvable:$true] %s86
      %92 = dma.hbm_to_vmem [thread:$0]  %s85, 4096, %s87, [#allocation9], 128, 128, 8
    $region37: #{tpu_custom_call.1} parent=1 // pred_fallthru
      _
    // Predicated region
    $region38: #{tpu_custom_call.1} parent=1 // pred_check
      _
    $region39: #{tpu_custom_call.1} parent=1 // pred_check_branch
      %94 = sbr.rel (0) target = $region41
    $region40: #{tpu_custom_call.1} parent=1 // pred_region
      _
    $region41: #{tpu_custom_call.1} parent=1 // pred_fallthru
      _
    // Predicated region
    $region42: #{tpu_custom_call.1} parent=1 // pred_check
      _
    $region43: #{tpu_custom_call.1} parent=1 // pred_check_branch
      %96 = sbr.rel (0) target = $region45
    $region44: #{tpu_custom_call.1} parent=1 // pred_region
      %98 = vsyncadd [#allocation12], 0
      %s99 = sshll.u32 %s10, 4
      %s100 = int_to_ptr.hbm [resolvable:$true] %s99
      %s101 = sshll.u32 [#allocation11], 4
      %s102 = int_to_ptr.vmem [resolvable:$true] %s101
      %107 = dma.hbm_to_vmem [thread:$0]  %s100, 4096, %s102, [#allocation12], 128, 128, 8
    $region45: #{tpu_custom_call.1} parent=1 // pred_fallthru
      _
    // Predicated region
    $region46: #{tpu_custom_call.1} parent=1 // pred_check
      _
    $region47: #{tpu_custom_call.1} parent=1 // pred_check_branch
      %109 = sbr.rel (0) target = $region49
    $region48: #{tpu_custom_call.1} parent=1 // pred_region
      _
    $region49: #{tpu_custom_call.1} parent=1 // pred_fallthru
      _
    // Predicated region
    $region50: #{tpu_custom_call.1} parent=1 // pred_check
      _
    $region51: #{tpu_custom_call.1} parent=1 // pred_check_branch
      %111 = sbr.rel (0) target = $region53
    $region52: #{tpu_custom_call.1} parent=1 // pred_region
      %113 = vsyncadd [#allocation12], 0
      %s114 = sshll.u32 %s12, 4
      %s115 = int_to_ptr.hbm [resolvable:$true] %s114
      %s116 = sshll.u32 [#allocation13], 4
      %s117 = int_to_ptr.vmem [resolvable:$true] %s116
      %122 = dma.hbm_to_vmem [thread:$0]  %s115, 2048, %s117, [#allocation12], 64, 64, 4
    $region53: #{tpu_custom_call.1} parent=1 // pred_fallthru
      _
    // Predicated region
    $region54: #{tpu_custom_call.1} parent=1 // pred_check
      _
    $region55: #{tpu_custom_call.1} parent=1 // pred_check_branch
      %124 = sbr.rel (0) target = $region57
    $region56: #{tpu_custom_call.1} parent=1 // pred_region
      _
    $region57: #{tpu_custom_call.1} parent=1 // pred_fallthru
      _
    // Predicated region
    $region58: #{tpu_custom_call.1} parent=1 // pred_check
      _
    $region59: #{tpu_custom_call.1} parent=1 // pred_check_branch
      %126 = sbr.rel (0) target = $region61
    $region60: #{tpu_custom_call.1} parent=1 // pred_region
      %128 = dma.done [#allocation3], 256
    $region61: #{tpu_custom_call.1} parent=1 // pred_fallthru
      _
    // Predicated region
    $region62: #{tpu_custom_call.1} parent=1 // pred_check
      _
    $region63: #{tpu_custom_call.1} parent=1 // pred_check_branch
      %130 = sbr.rel (0) target = $region65
    $region64: #{tpu_custom_call.1} parent=1 // pred_region
      %132 = dma.done [#allocation6], 64
    $region65: #{tpu_custom_call.1} parent=1 // pred_fallthru
      _
    // Predicated region
    $region66: #{tpu_custom_call.1} parent=1 // pred_check
      _
    $region67: #{tpu_custom_call.1} parent=1 // pred_check_branch
      %134 = sbr.rel (0) target = $region69
    $region68: #{tpu_custom_call.1} parent=1 // pred_region
      %136 = dma.done [#allocation6], 16
    $region69: #{tpu_custom_call.1} parent=1 // pred_fallthru
      _
    // Predicated region
    $region70: #{tpu_custom_call.1} parent=1 // pred_check
      _
    $region71: #{tpu_custom_call.1} parent=1 // pred_check_branch
      %138 = sbr.rel (0) target = $region73
    $region72: #{tpu_custom_call.1} parent=1 // pred_region
      %140 = dma.done [#allocation9], 896
    $region73: #{tpu_custom_call.1} parent=1 // pred_fallthru
      _
    // Predicated region
    $region74: #{tpu_custom_call.1} parent=1 // pred_check
      _
    $region75: #{tpu_custom_call.1} parent=1 // pred_check_branch
      %142 = sbr.rel (0) target = $region77
    $region76: #{tpu_custom_call.1} parent=1 // pred_region
      %144 = dma.done [#allocation9], 4096
    $region77: #{tpu_custom_call.1} parent=1 // pred_fallthru
      _
    // Predicated region
    $region78: #{tpu_custom_call.1} parent=1 // pred_check
      _
    $region79: #{tpu_custom_call.1} parent=1 // pred_check_branch
      %146 = sbr.rel (0) target = $region81
    $region80: #{tpu_custom_call.1} parent=1 // pred_region
      %148 = dma.done [#allocation12], 4096
    $region81: #{tpu_custom_call.1} parent=1 // pred_fallthru
      _
    // Predicated region
    $region82: #{tpu_custom_call.1} parent=1 // pred_check
      _
    $region83: #{tpu_custom_call.1} parent=1 // pred_check_branch
      %150 = sbr.rel (0) target = $region85
    $region84: #{tpu_custom_call.1} parent=1 // pred_region
      %152 = dma.done [#allocation12], 2048
    $region85: #{tpu_custom_call.1} parent=1 // pred_fallthru
      _
    %v154 = vld [vmem:[#allocation2] sm:$0xff]
    %v155 = vld [vmem:[#allocation2 + $0x8] sm:$0xff]
    %v156 = vld [vmem:[%s1] sm:$0xff]
    %v157 = vld [vmem:[%s1 + $0x8] sm:$0xff]
    %v158 = vld [vmem:[%s1 + $0x10] sm:$0xff]
    %v159 = vld [vmem:[%s1 + $0x18] sm:$0xff]
    %v160 = vld [vmem:[%s1 + $0x20] sm:$0xff]
    %v161 = vld [vmem:[%s1 + $0x28] sm:$0xff]
    %v162 = vld [vmem:[%s1 + $0x30] sm:$0xff]
    %vm163 = vcmask 457728
    %v165 = vsel %vm163, %v154, 0
    %v168 = vsel %vm163, %v155, 0
    %170 = vmatpush.msra.mxu0 0.0
    %171 = vmatpush.msra.mxu0 0.0
    %172 = vmatpush.msra.mxu0 0.0
    %173 = vmatpush.msra.mxu0 0.0
    %174 = vmatpush.msra.mxu0 0.0
    %175 = vmatpush.msra.mxu0 0.0
    %176 = vmatpush.msra.mxu0 0.0
    %177 = vmatpush.msra.mxu0 0.0
    %178 = vmatpush.msra.mxu0 0.0
    %179 = vmatpush.msra.mxu0 %v162
    %180 = vmatpush.msra.mxu0 %v161
    %181 = vmatpush.msra.mxu0 %v160
    %182 = vmatpush.msra.mxu0 %v159
    %183 = vmatpush.msra.mxu0 %v158
    %184 = vmatpush.msra.mxu0 %v157
    %185 = vmatpush.msra.mxu0 %v156
    %186 = vmatmul.f32.gmra.mxu0 %v165
    %v187 = vpop.f32.mrf.mxu0
    %v188 = vadd.f32 0.0, %v187
    %189 = vmatmul.f32.gmra.mxu0 %v168
    %v190 = vpop.f32.mrf.mxu0
    %v191 = vadd.f32 0.0, %v190
    %192 = vdwg.mxu0
    %v193 = vrcp.pop %v188
    %v194 = vmul.f32 %v188, %v193
    %v195 = vsub.f32 1.0, %v194
    %v196 = vmul.f32 %v193, %v195
    %v197 = vadd.f32 %v193, %v196
    %vm198 = vweird.f32 %v188
    %vm199 = vweird.f32 %v193
    %vm200 = vmor %vm198, %vm199
    %v201 = vsel %vm200, %v193, %v197
    %v202 = vand.u32 2147483647, %v188
    %vm203 = vcmp.eq.f32.partialorder %v202, 8.507059e+37
    %v204 = vand.u32 %v188, 2147483648
    %v205 = vor.u32 1.1754944e-38, %v204
    %v206 = vsel %vm203, %v205, %v201
    %v207 = vmul.f32 1.0, %v206
    %v208 = vrcp.pop %v191
    %v209 = vmul.f32 %v191, %v208
    %v210 = vsub.f32 1.0, %v209
    %v211 = vmul.f32 %v208, %v210
    %v212 = vadd.f32 %v208, %v211
    %vm213 = vweird.f32 %v191
    %vm214 = vweird.f32 %v208
    %vm215 = vmor %vm213, %vm214
    %v216 = vsel %vm215, %v208, %v212
    %v217 = vand.u32 2147483647, %v191
    %vm218 = vcmp.eq.f32.partialorder %v217, 8.507059e+37
    %v219 = vand.u32 %v191, 2147483648
    %v220 = vor.u32 1.1754944e-38, %v219
    %v221 = vsel %vm218, %v220, %v216
    %v222 = vmul.f32 1.0, %v221
    %224 = vset.pattern.permute.xlu0 3
    %225 = vperm.xlu0 %224, %v207
    %v226 = vpop.permute.xlu0 %225
    %229 = vset.pattern.permute.xlu0 3
    %230 = vperm.xlu0 %229, %v222
    %v231 = vpop.permute.xlu0 %230
    %v233 = vmul.f32 %v188, %v226
    %v234 = vmul.f32 %v191, %v231
    %v235 = vld [vmem:[%s2] sm:$0xf]
    %vm236 = vcmask 31744
    %v238 = vsel %vm236, %v233, 0
    %v241 = vsel %vm236, %v234, 0
    %vm243 = vcmask 1043456
    %v245 = vsel %vm243, %v235, 0
    %247 = vmatpush.msra.mxu0 0.0
    %248 = vmatpush.msra.mxu0 0.0
    %249 = vmatpush.msra.mxu0 0.0
    %250 = vmatpush.msra.mxu0 0.0
    %251 = vmatpush.msra.mxu0 0.0
    %252 = vmatpush.msra.mxu0 0.0
    %253 = vmatpush.msra.mxu0 0.0
    %254 = vmatpush.msra.mxu0 0.0
    %255 = vmatpush.msra.mxu0 0.0
    %256 = vmatpush.msra.mxu0 0.0
    %257 = vmatpush.msra.mxu0 0.0
    %258 = vmatpush.msra.mxu0 0.0
    %259 = vmatpush.msra.mxu0 0.0
    %260 = vmatpush.msra.mxu0 0.0
    %261 = vmatpush.msra.mxu0 0.0
    %262 = vmatpush.msra.mxu0 %v245
    %263 = vmatmul.f32.gmra.mxu0 %v238
    %v264 = vpop.f32.mrf.mxu0
    %v265 = vadd.f32 0.0, %v264
    %266 = vmatmul.f32.gmra.mxu0 %v241
    %v267 = vpop.f32.mrf.mxu0
    %v268 = vadd.f32 0.0, %v267
    %269 = vdwg.mxu0
    %v270 = vld [vmem:[%s3] sm:$0xff]
    %v271 = vld [vmem:[%s3 + $0x8] sm:$0xff]
    %v272 = vld [vmem:[%s3 + $0x10] sm:$0xff]
    %v273 = vld [vmem:[%s3 + $0x18] sm:$0xff]
    %v274 = vld [vmem:[%s3 + $0x20] sm:$0xff]
    %v275 = vld [vmem:[%s3 + $0x28] sm:$0xff]
    %v276 = vld [vmem:[%s3 + $0x30] sm:$0xff]
    %277 = vmatpush.msra.mxu0 0.0
    %278 = vmatpush.msra.mxu0 0.0
    %279 = vmatpush.msra.mxu0 0.0
    %280 = vmatpush.msra.mxu0 0.0
    %281 = vmatpush.msra.mxu0 0.0
    %282 = vmatpush.msra.mxu0 0.0
    %283 = vmatpush.msra.mxu0 0.0
    %284 = vmatpush.msra.mxu0 0.0
    %285 = vmatpush.msra.mxu0 0.0
    %286 = vmatpush.msra.mxu0 %v276
    %287 = vmatpush.msra.mxu0 %v275
    %288 = vmatpush.msra.mxu0 %v274
    %289 = vmatpush.msra.mxu0 %v273
    %290 = vmatpush.msra.mxu0 %v272
    %291 = vmatpush.msra.mxu0 %v271
    %292 = vmatpush.msra.mxu0 %v270
    %293 = vmatmul.f32.gmra.mxu0 %v165
    %v294 = vpop.f32.mrf.mxu0
    %v295 = vadd.f32 0.0, %v294
    %296 = vmatmul.f32.gmra.mxu0 %v168
    %v297 = vpop.f32.mrf.mxu0
    %v298 = vadd.f32 0.0, %v297
    %299 = vdwg.mxu0
    %v300 = vld [vmem:[#allocation7] sm:$0x1]
    %v301 = vsub.f32 %v154, %v265
    %v302 = vsub.f32 %v155, %v268
    %v303 = vmul.f32 %v301, %v295
    %v304 = vmul.f32 %v302, %v298
    %v306 = vperm.slane %v300, 0
    %v308 = vmul.f32 %v306, %v303
    %v309 = vmul.f32 %v306, %v304
    %v310 = vsub.f32 1.0, %v300
    %v312 = vperm.slane %v310, 0
    %v314 = vmul.f32 %v312, %v154
    %v315 = vmul.f32 %v312, %v155
    %v316 = vadd.f32 %v308, %v314
    %v317 = vadd.f32 %v309, %v315
    %v318 = vpack.c.bf16 %v317, %v316
    %v319 = vld [vmem:[#allocation8] sm:$0xff]
    %v320 = vld [vmem:[#allocation8 + $0x8] sm:$0xff]
    %v321 = vld [vmem:[#allocation8 + $0x10] sm:$0xff]
    %v322 = vld [vmem:[#allocation8 + $0x18] sm:$0xff]
    %v323 = vld [vmem:[#allocation8 + $0x20] sm:$0xff]
    %v324 = vld [vmem:[#allocation8 + $0x28] sm:$0xff]
    %v325 = vld [vmem:[#allocation8 + $0x30] sm:$0xff]
    %v326 = vld [vmem:[%s7] sm:$0x3]
    %v328 = vperm.slane %v326, 0
    %v329 = vperm.slane %v326, 1
    %v339 = vunpack.c.l.b16 %v319
    %v340 = vunpack.c.h.b16 %v319
    %v341 = vunpack.c.l.b16 %v320
    %v342 = vunpack.c.h.b16 %v320
    %v343 = vunpack.c.l.b16 %v321
    %v344 = vunpack.c.h.b16 %v321
    %v345 = vunpack.c.l.b16 %v322
    %v346 = vunpack.c.h.b16 %v322
    %v347 = vunpack.c.l.b16 %v323
    %v348 = vunpack.c.h.b16 %v323
    %v349 = vunpack.c.l.b16 %v324
    %v350 = vunpack.c.h.b16 %v324
    %v351 = vunpack.c.l.b16 %v325
    %v352 = vunpack.c.h.b16 %v325
    %v353 = vpack.c.b16 %v341, %v339
    %v354 = vpack.c.b16 %v342, %v340
    %v355 = vpack.c.b16 %v345, %v343
    %v356 = vpack.c.b16 %v346, %v344
    %v357 = vpack.c.b16 %v349, %v347
    %v358 = vpack.c.b16 %v350, %v348
    %v359 = vpack.c.b16 %v351, %v351
    %v360 = vpack.c.b16 %v352, %v352
    %v368 = vsel %vm163, %v318, 0
    %v371 = vsel %vm243, %v359, 0
    %v374 = vsel %vm243, %v360, 0
    %376 = vmatpush.bf16.msra.mxu0 0
    %377 = vmatpush.bf16.msra.mxu0 0
    %378 = vmatpush.bf16.msra.mxu0 0
    %379 = vmatpush.bf16.msra.mxu0 0
    %380 = vmatpush.bf16.msra.mxu0 %v371
    %381 = vmatpush.bf16.msra.mxu0 %v357
    %382 = vmatpush.bf16.msra.mxu0 %v355
    %383 = vmatpush.bf16.msra.mxu0 %v353
    %384 = vmatmul.bf16.gmra.mxu0 %v368
    %v385 = vpop.f32.mrf.mxu0
    %v386 = vadd.f32 %v328, %v385
    %v387 = vpop.f32.mrf.mxu0
    %v388 = vadd.f32 %v328, %v387
    %389 = vdwg.mxu0
    %390 = vmatpush.bf16.msra.mxu0 0
    %391 = vmatpush.bf16.msra.mxu0 0
    %392 = vmatpush.bf16.msra.mxu0 0
    %393 = vmatpush.bf16.msra.mxu0 0
    %394 = vmatpush.bf16.msra.mxu0 %v374
    %395 = vmatpush.bf16.msra.mxu0 %v358
    %396 = vmatpush.bf16.msra.mxu0 %v356
    %397 = vmatpush.bf16.msra.mxu0 %v354
    %398 = vmatmul.bf16.gmra.mxu0 %v368
    %v399 = vpop.f32.mrf.mxu0
    %v400 = vadd.f32 %v329, %v399
    %v401 = vpop.f32.mrf.mxu0
    %v402 = vadd.f32 %v329, %v401
    %403 = vdwg.mxu0
    %v404 = vmax.f32 %v386, 0.0
    %v405 = vmax.f32 %v400, 0.0
    %v406 = vmax.f32 %v388, 0.0
    %v407 = vmax.f32 %v402, 0.0
    %v408 = vpack.c.bf16 %v406, %v404
    %v409 = vpack.c.bf16 %v407, %v405
    %v410 = vld [vmem:[#allocation10] sm:$0xff]
    %v411 = vld [vmem:[#allocation10 + $0x8] sm:$0xff]
    %v412 = vld [vmem:[#allocation10 + $0x10] sm:$0xff]
    %v413 = vld [vmem:[#allocation10 + $0x18] sm:$0xff]
    %v414 = vld [vmem:[#allocation10 + $0x20] sm:$0xff]
    %v415 = vld [vmem:[#allocation10 + $0x28] sm:$0xff]
    %v416 = vld [vmem:[#allocation10 + $0x30] sm:$0xff]
    %v417 = vld [vmem:[#allocation10 + $0x38] sm:$0xff]
    %v418 = vld [vmem:[#allocation10 + $0x40] sm:$0xff]
    %v419 = vld [vmem:[#allocation10 + $0x48] sm:$0xff]
    %v420 = vld [vmem:[#allocation10 + $0x50] sm:$0xff]
    %v421 = vld [vmem:[#allocation10 + $0x58] sm:$0xff]
    %v422 = vld [vmem:[#allocation10 + $0x60] sm:$0xff]
    %v423 = vld [vmem:[#allocation10 + $0x68] sm:$0xff]
    %v424 = vld [vmem:[#allocation10 + $0x70] sm:$0xff]
    %v425 = vld [vmem:[#allocation10 + $0x78] sm:$0xff]
    %v426 = vld [vmem:[#allocation10 + $0x80] sm:$0xff]
    %v427 = vld [vmem:[#allocation10 + $0x88] sm:$0xff]
    %v428 = vld [vmem:[#allocation10 + $0x90] sm:$0xff]
    %v429 = vld [vmem:[#allocation10 + $0x98] sm:$0xff]
    %v430 = vld [vmem:[#allocation10 + $0xa0] sm:$0xff]
    %v431 = vld [vmem:[#allocation10 + $0xa8] sm:$0xff]
    %v432 = vld [vmem:[#allocation10 + $0xb0] sm:$0xff]
    %v433 = vld [vmem:[#allocation10 + $0xb8] sm:$0xff]
    %v434 = vld [vmem:[#allocation10 + $0xc0] sm:$0xff]
    %v435 = vld [vmem:[#allocation10 + $0xc8] sm:$0xff]
    %v436 = vld [vmem:[#allocation10 + $0xd0] sm:$0xff]
    %v437 = vld [vmem:[#allocation10 + $0xd8] sm:$0xff]
    %v438 = vld [vmem:[#allocation10 + $0xe0] sm:$0xff]
    %v439 = vld [vmem:[#allocation10 + $0xe8] sm:$0xff]
    %v440 = vld [vmem:[#allocation10 + $0xf0] sm:$0xff]
    %v441 = vld [vmem:[#allocation10 + $0xf8] sm:$0xff]
    %v442 = vld [vmem:[%s9] sm:$0x3]
    %v444 = vperm.slane %v442, 0
    %v445 = vperm.slane %v442, 1
    %v480 = vunpack.c.l.b16 %v410
    %v481 = vunpack.c.h.b16 %v410
    %v482 = vunpack.c.l.b16 %v411
    %v483 = vunpack.c.h.b16 %v411
    %v484 = vunpack.c.l.b16 %v412
    %v485 = vunpack.c.h.b16 %v412
    %v486 = vunpack.c.l.b16 %v413
    %v487 = vunpack.c.h.b16 %v413
    %v488 = vunpack.c.l.b16 %v414
    %v489 = vunpack.c.h.b16 %v414
    %v490 = vunpack.c.l.b16 %v415
    %v491 = vunpack.c.h.b16 %v415
    %v492 = vunpack.c.l.b16 %v416
    %v493 = vunpack.c.h.b16 %v416
    %v494 = vunpack.c.l.b16 %v417
    %v495 = vunpack.c.h.b16 %v417
    %v496 = vunpack.c.l.b16 %v418
    %v497 = vunpack.c.h.b16 %v418
    %v498 = vunpack.c.l.b16 %v419
    %v499 = vunpack.c.h.b16 %v419
    %v500 = vunpack.c.l.b16 %v420
    %v501 = vunpack.c.h.b16 %v420
    %v502 = vunpack.c.l.b16 %v421
    %v503 = vunpack.c.h.b16 %v421
    %v504 = vunpack.c.l.b16 %v422
    %v505 = vunpack.c.h.b16 %v422
    %v506 = vunpack.c.l.b16 %v423
    %v507 = vunpack.c.h.b16 %v423
    %v508 = vunpack.c.l.b16 %v424
    %v509 = vunpack.c.h.b16 %v424
    %v510 = vunpack.c.l.b16 %v425
    %v511 = vunpack.c.h.b16 %v425
    %v512 = vunpack.c.l.b16 %v426
    %v513 = vunpack.c.h.b16 %v426
    %v514 = vunpack.c.l.b16 %v427
    %v515 = vunpack.c.h.b16 %v427
    %v516 = vunpack.c.l.b16 %v428
    %v517 = vunpack.c.h.b16 %v428
    %v518 = vunpack.c.l.b16 %v429
    %v519 = vunpack.c.h.b16 %v429
    %v520 = vunpack.c.l.b16 %v430
    %v521 = vunpack.c.h.b16 %v430
    %v522 = vunpack.c.l.b16 %v431
    %v523 = vunpack.c.h.b16 %v431
    %v524 = vunpack.c.l.b16 %v432
    %v525 = vunpack.c.h.b16 %v432
    %v526 = vunpack.c.l.b16 %v433
    %v527 = vunpack.c.h.b16 %v433
    %v528 = vunpack.c.l.b16 %v434
    %v529 = vunpack.c.h.b16 %v434
    %v530 = vunpack.c.l.b16 %v435
    %v531 = vunpack.c.h.b16 %v435
    %v532 = vunpack.c.l.b16 %v436
    %v533 = vunpack.c.h.b16 %v436
    %v534 = vunpack.c.l.b16 %v437
    %v535 = vunpack.c.h.b16 %v437
    %v536 = vunpack.c.l.b16 %v438
    %v537 = vunpack.c.h.b16 %v438
    %v538 = vunpack.c.l.b16 %v439
    %v539 = vunpack.c.h.b16 %v439
    %v540 = vunpack.c.l.b16 %v440
    %v541 = vunpack.c.h.b16 %v440
    %v542 = vunpack.c.l.b16 %v441
    %v543 = vunpack.c.h.b16 %v441
    %v544 = vpack.c.b16 %v482, %v480
    %v545 = vpack.c.b16 %v483, %v481
    %v546 = vpack.c.b16 %v486, %v484
    %v547 = vpack.c.b16 %v487, %v485
    %v548 = vpack.c.b16 %v490, %v488
    %v549 = vpack.c.b16 %v491, %v489
    %v550 = vpack.c.b16 %v494, %v492
    %v551 = vpack.c.b16 %v495, %v493
    %v552 = vpack.c.b16 %v498, %v496
    %v553 = vpack.c.b16 %v499, %v497
    %v554 = vpack.c.b16 %v502, %v500
    %v555 = vpack.c.b16 %v503, %v501
    %v556 = vpack.c.b16 %v506, %v504
    %v557 = vpack.c.b16 %v507, %v505
    %v558 = vpack.c.b16 %v510, %v508
    %v559 = vpack.c.b16 %v511, %v509
    %v560 = vpack.c.b16 %v514, %v512
    %v561 = vpack.c.b16 %v515, %v513
    %v562 = vpack.c.b16 %v518, %v516
    %v563 = vpack.c.b16 %v519, %v517
    %v564 = vpack.c.b16 %v522, %v520
    %v565 = vpack.c.b16 %v523, %v521
    %v566 = vpack.c.b16 %v526, %v524
    %v567 = vpack.c.b16 %v527, %v525
    %v568 = vpack.c.b16 %v530, %v528
    %v569 = vpack.c.b16 %v531, %v529
    %v570 = vpack.c.b16 %v534, %v532
    %v571 = vpack.c.b16 %v535, %v533
    %v572 = vpack.c.b16 %v538, %v536
    %v573 = vpack.c.b16 %v539, %v537
    %v574 = vpack.c.b16 %v542, %v540
    %v575 = vpack.c.b16 %v543, %v541
    %608 = vmatpush.bf16.msra.mxu0 %v558
    %609 = vmatpush.bf16.msra.mxu0 %v556
    %610 = vmatpush.bf16.msra.mxu0 %v554
    %611 = vmatpush.bf16.msra.mxu0 %v552
    %612 = vmatpush.bf16.msra.mxu0 %v550
    %613 = vmatpush.bf16.msra.mxu0 %v548
    %614 = vmatpush.bf16.msra.mxu0 %v546
    %615 = vmatpush.bf16.msra.mxu0 %v544
    %616 = vmatmul.bf16.gmra.mxu0 %v408
    %v617 = vpop.f32.mrf.mxu0
    %v618 = vadd.f32 %v444, %v617
    %v619 = vpop.f32.mrf.mxu0
    %v620 = vadd.f32 %v444, %v619
    %621 = vdwg.mxu0
    %622 = vmatpush.bf16.msra.mxu0 %v574
    %623 = vmatpush.bf16.msra.mxu0 %v572
    %624 = vmatpush.bf16.msra.mxu0 %v570
    %625 = vmatpush.bf16.msra.mxu0 %v568
    %626 = vmatpush.bf16.msra.mxu0 %v566
    %627 = vmatpush.bf16.msra.mxu0 %v564
    %628 = vmatpush.bf16.msra.mxu0 %v562
    %629 = vmatpush.bf16.msra.mxu0 %v560
    %630 = vmatmul.bf16.gmra.mxu0 %v409
    %v631 = vpop.f32.mrf.mxu0
    %v632 = vadd.f32 %v618, %v631
    %v633 = vpop.f32.mrf.mxu0
    %v634 = vadd.f32 %v620, %v633
    %635 = vdwg.mxu0
    %636 = vmatpush.bf16.msra.mxu0 %v559
    %637 = vmatpush.bf16.msra.mxu0 %v557
    %638 = vmatpush.bf16.msra.mxu0 %v555
    %639 = vmatpush.bf16.msra.mxu0 %v553
    %640 = vmatpush.bf16.msra.mxu0 %v551
    %641 = vmatpush.bf16.msra.mxu0 %v549
    %642 = vmatpush.bf16.msra.mxu0 %v547
    %643 = vmatpush.bf16.msra.mxu0 %v545
    %644 = vmatmul.bf16.gmra.mxu0 %v408
    %v645 = vpop.f32.mrf.mxu0
    %v646 = vadd.f32 %v445, %v645
    %v647 = vpop.f32.mrf.mxu0
    %v648 = vadd.f32 %v445, %v647
    %649 = vdwg.mxu0
    %650 = vmatpush.bf16.msra.mxu0 %v575
    %651 = vmatpush.bf16.msra.mxu0 %v573
    %652 = vmatpush.bf16.msra.mxu0 %v571
    %653 = vmatpush.bf16.msra.mxu0 %v569
    %654 = vmatpush.bf16.msra.mxu0 %v567
    %655 = vmatpush.bf16.msra.mxu0 %v565
    %656 = vmatpush.bf16.msra.mxu0 %v563
    %657 = vmatpush.bf16.msra.mxu0 %v561
    %658 = vmatmul.bf16.gmra.mxu0 %v409
    %v659 = vpop.f32.mrf.mxu0
    %v660 = vadd.f32 %v646, %v659
    %v661 = vpop.f32.mrf.mxu0
    %v662 = vadd.f32 %v648, %v661
    %663 = vdwg.mxu0
    %v664 = vmax.f32 %v632, 0.0
    %v665 = vmax.f32 %v660, 0.0
    %v666 = vmax.f32 %v634, 0.0
    %v667 = vmax.f32 %v662, 0.0
    %v668 = vpack.c.bf16 %v666, %v664
    %v669 = vpack.c.bf16 %v667, %v665
    %v670 = vld [vmem:[#allocation11] sm:$0xff]
    %v671 = vld [vmem:[#allocation11 + $0x8] sm:$0xff]
    %v672 = vld [vmem:[#allocation11 + $0x10] sm:$0xff]
    %v673 = vld [vmem:[#allocation11 + $0x18] sm:$0xff]
    %v674 = vld [vmem:[#allocation11 + $0x20] sm:$0xff]
    %v675 = vld [vmem:[#allocation11 + $0x28] sm:$0xff]
    %v676 = vld [vmem:[#allocation11 + $0x30] sm:$0xff]
    %v677 = vld [vmem:[#allocation11 + $0x38] sm:$0xff]
    %v678 = vld [vmem:[#allocation11 + $0x40] sm:$0xff]
    %v679 = vld [vmem:[#allocation11 + $0x48] sm:$0xff]
    %v680 = vld [vmem:[#allocation11 + $0x50] sm:$0xff]
    %v681 = vld [vmem:[#allocation11 + $0x58] sm:$0xff]
    %v682 = vld [vmem:[#allocation11 + $0x60] sm:$0xff]
    %v683 = vld [vmem:[#allocation11 + $0x68] sm:$0xff]
    %v684 = vld [vmem:[#allocation11 + $0x70] sm:$0xff]
    %v685 = vld [vmem:[#allocation11 + $0x78] sm:$0xff]
    %v686 = vld [vmem:[#allocation11 + $0x80] sm:$0xff]
    %v687 = vld [vmem:[#allocation11 + $0x88] sm:$0xff]
    %v688 = vld [vmem:[#allocation11 + $0x90] sm:$0xff]
    %v689 = vld [vmem:[#allocation11 + $0x98] sm:$0xff]
    %v690 = vld [vmem:[#allocation11 + $0xa0] sm:$0xff]
    %v691 = vld [vmem:[#allocation11 + $0xa8] sm:$0xff]
    %v692 = vld [vmem:[#allocation11 + $0xb0] sm:$0xff]
    %v693 = vld [vmem:[#allocation11 + $0xb8] sm:$0xff]
    %v694 = vld [vmem:[#allocation11 + $0xc0] sm:$0xff]
    %v695 = vld [vmem:[#allocation11 + $0xc8] sm:$0xff]
    %v696 = vld [vmem:[#allocation11 + $0xd0] sm:$0xff]
    %v697 = vld [vmem:[#allocation11 + $0xd8] sm:$0xff]
    %v698 = vld [vmem:[#allocation11 + $0xe0] sm:$0xff]
    %v699 = vld [vmem:[#allocation11 + $0xe8] sm:$0xff]
    %v700 = vld [vmem:[#allocation11 + $0xf0] sm:$0xff]
    %v701 = vld [vmem:[#allocation11 + $0xf8] sm:$0xff]
    %v702 = vld [vmem:[%s11] sm:$0x3]
    %v704 = vperm.slane %v702, 0
    %v705 = vperm.slane %v702, 1
    %v740 = vunpack.c.l.b16 %v670
    %v741 = vunpack.c.h.b16 %v670
    %v742 = vunpack.c.l.b16 %v671
    %v743 = vunpack.c.h.b16 %v671
    %v744 = vunpack.c.l.b16 %v672
    %v745 = vunpack.c.h.b16 %v672
    %v746 = vunpack.c.l.b16 %v673
    %v747 = vunpack.c.h.b16 %v673
    %v748 = vunpack.c.l.b16 %v674
    %v749 = vunpack.c.h.b16 %v674
    %v750 = vunpack.c.l.b16 %v675
    %v751 = vunpack.c.h.b16 %v675
    %v752 = vunpack.c.l.b16 %v676
    %v753 = vunpack.c.h.b16 %v676
    %v754 = vunpack.c.l.b16 %v677
    %v755 = vunpack.c.h.b16 %v677
    %v756 = vunpack.c.l.b16 %v678
    %v757 = vunpack.c.h.b16 %v678
    %v758 = vunpack.c.l.b16 %v679
    %v759 = vunpack.c.h.b16 %v679
    %v760 = vunpack.c.l.b16 %v680
    %v761 = vunpack.c.h.b16 %v680
    %v762 = vunpack.c.l.b16 %v681
    %v763 = vunpack.c.h.b16 %v681
    %v764 = vunpack.c.l.b16 %v682
    %v765 = vunpack.c.h.b16 %v682
    %v766 = vunpack.c.l.b16 %v683
    %v767 = vunpack.c.h.b16 %v683
    %v768 = vunpack.c.l.b16 %v684
    %v769 = vunpack.c.h.b16 %v684
    %v770 = vunpack.c.l.b16 %v685
    %v771 = vunpack.c.h.b16 %v685
    %v772 = vunpack.c.l.b16 %v686
    %v773 = vunpack.c.h.b16 %v686
    %v774 = vunpack.c.l.b16 %v687
    %v775 = vunpack.c.h.b16 %v687
    %v776 = vunpack.c.l.b16 %v688
    %v777 = vunpack.c.h.b16 %v688
    %v778 = vunpack.c.l.b16 %v689
    %v779 = vunpack.c.h.b16 %v689
    %v780 = vunpack.c.l.b16 %v690
    %v781 = vunpack.c.h.b16 %v690
    %v782 = vunpack.c.l.b16 %v691
    %v783 = vunpack.c.h.b16 %v691
    %v784 = vunpack.c.l.b16 %v692
    %v785 = vunpack.c.h.b16 %v692
    %v786 = vunpack.c.l.b16 %v693
    %v787 = vunpack.c.h.b16 %v693
    %v788 = vunpack.c.l.b16 %v694
    %v789 = vunpack.c.h.b16 %v694
    %v790 = vunpack.c.l.b16 %v695
    %v791 = vunpack.c.h.b16 %v695
    %v792 = vunpack.c.l.b16 %v696
    %v793 = vunpack.c.h.b16 %v696
    %v794 = vunpack.c.l.b16 %v697
    %v795 = vunpack.c.h.b16 %v697
    %v796 = vunpack.c.l.b16 %v698
    %v797 = vunpack.c.h.b16 %v698
    %v798 = vunpack.c.l.b16 %v699
    %v799 = vunpack.c.h.b16 %v699
    %v800 = vunpack.c.l.b16 %v700
    %v801 = vunpack.c.h.b16 %v700
    %v802 = vunpack.c.l.b16 %v701
    %v803 = vunpack.c.h.b16 %v701
    %v804 = vpack.c.b16 %v742, %v740
    %v805 = vpack.c.b16 %v743, %v741
    %v806 = vpack.c.b16 %v746, %v744
    %v807 = vpack.c.b16 %v747, %v745
    %v808 = vpack.c.b16 %v750, %v748
    %v809 = vpack.c.b16 %v751, %v749
    %v810 = vpack.c.b16 %v754, %v752
    %v811 = vpack.c.b16 %v755, %v753
    %v812 = vpack.c.b16 %v758, %v756
    %v813 = vpack.c.b16 %v759, %v757
    %v814 = vpack.c.b16 %v762, %v760
    %v815 = vpack.c.b16 %v763, %v761
    %v816 = vpack.c.b16 %v766, %v764
    %v817 = vpack.c.b16 %v767, %v765
    %v818 = vpack.c.b16 %v770, %v768
    %v819 = vpack.c.b16 %v771, %v769
    %v820 = vpack.c.b16 %v774, %v772
    %v821 = vpack.c.b16 %v775, %v773
    %v822 = vpack.c.b16 %v778, %v776
    %v823 = vpack.c.b16 %v779, %v777
    %v824 = vpack.c.b16 %v782, %v780
    %v825 = vpack.c.b16 %v783, %v781
    %v826 = vpack.c.b16 %v786, %v784
    %v827 = vpack.c.b16 %v787, %v785
    %v828 = vpack.c.b16 %v790, %v788
    %v829 = vpack.c.b16 %v791, %v789
    %v830 = vpack.c.b16 %v794, %v792
    %v831 = vpack.c.b16 %v795, %v793
    %v832 = vpack.c.b16 %v798, %v796
    %v833 = vpack.c.b16 %v799, %v797
    %v834 = vpack.c.b16 %v802, %v800
    %v835 = vpack.c.b16 %v803, %v801
    %868 = vmatpush.bf16.msra.mxu0 %v818
    %869 = vmatpush.bf16.msra.mxu0 %v816
    %870 = vmatpush.bf16.msra.mxu0 %v814
    %871 = vmatpush.bf16.msra.mxu0 %v812
    %872 = vmatpush.bf16.msra.mxu0 %v810
    %873 = vmatpush.bf16.msra.mxu0 %v808
    %874 = vmatpush.bf16.msra.mxu0 %v806
    %875 = vmatpush.bf16.msra.mxu0 %v804
    %876 = vmatmul.bf16.gmra.mxu0 %v668
    %v877 = vpop.f32.mrf.mxu0
    %v878 = vadd.f32 %v704, %v877
    %v879 = vpop.f32.mrf.mxu0
    %v880 = vadd.f32 %v704, %v879
    %881 = vdwg.mxu0
    %882 = vmatpush.bf16.msra.mxu0 %v834
    %883 = vmatpush.bf16.msra.mxu0 %v832
    %884 = vmatpush.bf16.msra.mxu0 %v830
    %885 = vmatpush.bf16.msra.mxu0 %v828
    %886 = vmatpush.bf16.msra.mxu0 %v826
    %887 = vmatpush.bf16.msra.mxu0 %v824
    %888 = vmatpush.bf16.msra.mxu0 %v822
    %889 = vmatpush.bf16.msra.mxu0 %v820
    %890 = vmatmul.bf16.gmra.mxu0 %v669
    %v891 = vpop.f32.mrf.mxu0
    %v892 = vadd.f32 %v878, %v891
    %v893 = vpop.f32.mrf.mxu0
    %v894 = vadd.f32 %v880, %v893
    %895 = vdwg.mxu0
    %896 = vmatpush.bf16.msra.mxu0 %v819
    %897 = vmatpush.bf16.msra.mxu0 %v817
    %898 = vmatpush.bf16.msra.mxu0 %v815
    %899 = vmatpush.bf16.msra.mxu0 %v813
    %900 = vmatpush.bf16.msra.mxu0 %v811
    %901 = vmatpush.bf16.msra.mxu0 %v809
    %902 = vmatpush.bf16.msra.mxu0 %v807
    %903 = vmatpush.bf16.msra.mxu0 %v805
    %904 = vmatmul.bf16.gmra.mxu0 %v668
    %v905 = vpop.f32.mrf.mxu0
    %v906 = vadd.f32 %v705, %v905
    %v907 = vpop.f32.mrf.mxu0
    %v908 = vadd.f32 %v705, %v907
    %909 = vdwg.mxu0
    %910 = vmatpush.bf16.msra.mxu0 %v835
    %911 = vmatpush.bf16.msra.mxu0 %v833
    %912 = vmatpush.bf16.msra.mxu0 %v831
    %913 = vmatpush.bf16.msra.mxu0 %v829
    %914 = vmatpush.bf16.msra.mxu0 %v827
    %915 = vmatpush.bf16.msra.mxu0 %v825
    %916 = vmatpush.bf16.msra.mxu0 %v823
    %917 = vmatpush.bf16.msra.mxu0 %v821
    %918 = vmatmul.bf16.gmra.mxu0 %v669
    %v919 = vpop.f32.mrf.mxu0
    %v920 = vadd.f32 %v906, %v919
    %v921 = vpop.f32.mrf.mxu0
    %v922 = vadd.f32 %v908, %v921
    %923 = vdwg.mxu0
    %v924 = vmax.f32 %v892, 0.0
    %v925 = vmax.f32 %v920, 0.0
    %v926 = vmax.f32 %v894, 0.0
    %v927 = vmax.f32 %v922, 0.0
    %v928 = vpack.c.bf16 %v926, %v924
    %v929 = vpack.c.bf16 %v927, %v925
    %v930 = vld [vmem:[#allocation13] sm:$0xf]
    %v931 = vld [vmem:[#allocation13 + $0x4] sm:$0xf]
    %v932 = vld [vmem:[#allocation13 + $0x8] sm:$0xf]
    %v933 = vld [vmem:[#allocation13 + $0xc] sm:$0xf]
    %v934 = vld [vmem:[#allocation13 + $0x10] sm:$0xf]
    %v935 = vld [vmem:[#allocation13 + $0x14] sm:$0xf]
    %v936 = vld [vmem:[#allocation13 + $0x18] sm:$0xf]
    %v937 = vld [vmem:[#allocation13 + $0x1c] sm:$0xf]
    %v938 = vld [vmem:[#allocation13 + $0x20] sm:$0xf]
    %v939 = vld [vmem:[#allocation13 + $0x24] sm:$0xf]
    %v940 = vld [vmem:[#allocation13 + $0x28] sm:$0xf]
    %v941 = vld [vmem:[#allocation13 + $0x2c] sm:$0xf]
    %v942 = vld [vmem:[#allocation13 + $0x30] sm:$0xf]
    %v943 = vld [vmem:[#allocation13 + $0x34] sm:$0xf]
    %v944 = vld [vmem:[#allocation13 + $0x38] sm:$0xf]
    %v945 = vld [vmem:[#allocation13 + $0x3c] sm:$0xf]
    %v946 = vld [vmem:[#allocation13 + $0x40] sm:$0xf]
    %v947 = vld [vmem:[#allocation13 + $0x44] sm:$0xf]
    %v948 = vld [vmem:[#allocation13 + $0x48] sm:$0xf]
    %v949 = vld [vmem:[#allocation13 + $0x4c] sm:$0xf]
    %v950 = vld [vmem:[#allocation13 + $0x50] sm:$0xf]
    %v951 = vld [vmem:[#allocation13 + $0x54] sm:$0xf]
    %v952 = vld [vmem:[#allocation13 + $0x58] sm:$0xf]
    %v953 = vld [vmem:[#allocation13 + $0x5c] sm:$0xf]
    %v954 = vld [vmem:[#allocation13 + $0x60] sm:$0xf]
    %v955 = vld [vmem:[#allocation13 + $0x64] sm:$0xf]
    %v956 = vld [vmem:[#allocation13 + $0x68] sm:$0xf]
    %v957 = vld [vmem:[#allocation13 + $0x6c] sm:$0xf]
    %v958 = vld [vmem:[#allocation13 + $0x70] sm:$0xf]
    %v959 = vld [vmem:[#allocation13 + $0x74] sm:$0xf]
    %v960 = vld [vmem:[#allocation13 + $0x78] sm:$0xf]
    %v961 = vld [vmem:[#allocation13 + $0x7c] sm:$0xf]
    %v962 = vld [vmem:[%s13] sm:$0x1]
    %v964 = vperm.slane %v962, 0
    %v998 = vunpack.c.l.b16 %v930
    %v999 = vunpack.c.l.b16 %v931
    %v1000 = vunpack.c.l.b16 %v932
    %v1001 = vunpack.c.l.b16 %v933
    %v1002 = vunpack.c.l.b16 %v934
    %v1003 = vunpack.c.l.b16 %v935
    %v1004 = vunpack.c.l.b16 %v936
    %v1005 = vunpack.c.l.b16 %v937
    %v1006 = vunpack.c.l.b16 %v938
    %v1007 = vunpack.c.l.b16 %v939
    %v1008 = vunpack.c.l.b16 %v940
    %v1009 = vunpack.c.l.b16 %v941
    %v1010 = vunpack.c.l.b16 %v942
    %v1011 = vunpack.c.l.b16 %v943
    %v1012 = vunpack.c.l.b16 %v944
    %v1013 = vunpack.c.l.b16 %v945
    %v1014 = vunpack.c.l.b16 %v946
    %v1015 = vunpack.c.l.b16 %v947
    %v1016 = vunpack.c.l.b16 %v948
    %v1017 = vunpack.c.l.b16 %v949
    %v1018 = vunpack.c.l.b16 %v950
    %v1019 = vunpack.c.l.b16 %v951
    %v1020 = vunpack.c.l.b16 %v952
    %v1021 = vunpack.c.l.b16 %v953
    %v1022 = vunpack.c.l.b16 %v954
    %v1023 = vunpack.c.l.b16 %v955
    %v1024 = vunpack.c.l.b16 %v956
    %v1025 = vunpack.c.l.b16 %v957
    %v1026 = vunpack.c.l.b16 %v958
    %v1027 = vunpack.c.l.b16 %v959
    %v1028 = vunpack.c.l.b16 %v960
    %v1029 = vunpack.c.l.b16 %v961
    %v1030 = vpack.c.b16 %v999, %v998
    %v1031 = vpack.c.b16 %v1001, %v1000
    %v1032 = vpack.c.b16 %v1003, %v1002
    %v1033 = vpack.c.b16 %v1005, %v1004
    %v1034 = vpack.c.b16 %v1007, %v1006
    %v1035 = vpack.c.b16 %v1009, %v1008
    %v1036 = vpack.c.b16 %v1011, %v1010
    %v1037 = vpack.c.b16 %v1013, %v1012
    %v1038 = vpack.c.b16 %v1015, %v1014
    %v1039 = vpack.c.b16 %v1017, %v1016
    %v1040 = vpack.c.b16 %v1019, %v1018
    %v1041 = vpack.c.b16 %v1021, %v1020
    %v1042 = vpack.c.b16 %v1023, %v1022
    %v1043 = vpack.c.b16 %v1025, %v1024
    %v1044 = vpack.c.b16 %v1027, %v1026
    %v1045 = vpack.c.b16 %v1029, %v1028
    %1062 = vmatpush.bf16.msra.mxu0 %v1037
    %1063 = vmatpush.bf16.msra.mxu0 %v1036
    %1064 = vmatpush.bf16.msra.mxu0 %v1035
    %1065 = vmatpush.bf16.msra.mxu0 %v1034
    %1066 = vmatpush.bf16.msra.mxu0 %v1033
    %1067 = vmatpush.bf16.msra.mxu0 %v1032
    %1068 = vmatpush.bf16.msra.mxu0 %v1031
    %1069 = vmatpush.bf16.msra.mxu0 %v1030
    %1070 = vmatmul.bf16.gmra.mxu0 %v928
    %v1071 = vpop.f32.mrf.mxu0
    %v1072 = vadd.f32 %v964, %v1071
    %v1073 = vpop.f32.mrf.mxu0
    %v1074 = vadd.f32 %v964, %v1073
    %1075 = vdwg.mxu0
    %1076 = vmatpush.bf16.msra.mxu0 %v1045
    %1077 = vmatpush.bf16.msra.mxu0 %v1044
    %1078 = vmatpush.bf16.msra.mxu0 %v1043
    %1079 = vmatpush.bf16.msra.mxu0 %v1042
    %1080 = vmatpush.bf16.msra.mxu0 %v1041
    %1081 = vmatpush.bf16.msra.mxu0 %v1040
    %1082 = vmatpush.bf16.msra.mxu0 %v1039
    %1083 = vmatpush.bf16.msra.mxu0 %v1038
    %1084 = vmatmul.bf16.gmra.mxu0 %v929
    %v1085 = vpop.f32.mrf.mxu0
    %v1086 = vadd.f32 %v1072, %v1085
    %v1087 = vpop.f32.mrf.mxu0
    %v1088 = vadd.f32 %v1074, %v1087
    %1089 = vdwg.mxu0
    %v1090 = vld [vmem:[#allocation5] sm:$0xf]
    %v1092 = vsel %vm243, %v1090, 0
    %1094 = vmatpush.msra.mxu0 0.0
    %1095 = vmatpush.msra.mxu0 0.0
    %1096 = vmatpush.msra.mxu0 0.0
    %1097 = vmatpush.msra.mxu0 0.0
    %1098 = vmatpush.msra.mxu0 0.0
    %1099 = vmatpush.msra.mxu0 0.0
    %1100 = vmatpush.msra.mxu0 0.0
    %1101 = vmatpush.msra.mxu0 0.0
    %1102 = vmatpush.msra.mxu0 0.0
    %1103 = vmatpush.msra.mxu0 0.0
    %1104 = vmatpush.msra.mxu0 0.0
    %1105 = vmatpush.msra.mxu0 0.0
    %1106 = vmatpush.msra.mxu0 0.0
    %1107 = vmatpush.msra.mxu0 0.0
    %1108 = vmatpush.msra.mxu0 0.0
    %1109 = vmatpush.msra.mxu0 %v1092
    %1110 = vmatmul.f32.gmra.mxu0 %v238
    %v1111 = vpop.f32.mrf.mxu0
    %v1112 = vadd.f32 0.0, %v1111
    %1113 = vmatmul.f32.gmra.mxu0 %v241
    %v1114 = vpop.f32.mrf.mxu0
    %v1115 = vadd.f32 0.0, %v1114
    %1116 = vdwg.mxu0
    %v1117 = vadd.f32 %v1086, %v1112
    %v1118 = vadd.f32 %v1088, %v1115
    %1119 = vst [vmem:[#allocation14] sm:$0xff] %v1117
    %1120 = vst [vmem:[#allocation14 + $0x8] sm:$0xff] %v1118
    // Predicated region
    $region86: #{tpu_custom_call.1} parent=1 // pred_check
      _
    $region87: #{tpu_custom_call.1} parent=1 // pred_check_branch
      %1122 = sbr.rel (0) target = $region89
    $region88: #{tpu_custom_call.1} parent=1 // pred_region
      %1124 = vsyncadd [#allocation4], 0
      %s1125 = sshll.u32 [#allocation14], 4
      %s1126 = int_to_ptr.vmem [resolvable:$true] %s1125
      %s1127 = sshll.u32 %s14, 4
      %s1128 = int_to_ptr.hbm [resolvable:$true] %s1127
      %1133 = dma.vmem_to_hbm [thread:$0]  %s1126, 256, %s1128, [#allocation4], 128, 128, 8
    $region89: #{tpu_custom_call.1} parent=1 // pred_fallthru
      _
    // Predicated region
    $region90: #{tpu_custom_call.1} parent=1 // pred_check
      _
    $region91: #{tpu_custom_call.1} parent=1 // pred_check_branch
      %1135 = sbr.rel (0) target = $region93
    $region92: #{tpu_custom_call.1} parent=1 // pred_region
      %1137 = dma.done [#allocation4], 256
    $region93: #{tpu_custom_call.1} parent=1 // pred_fallthru
      _
    %1138 = vsyncpa [#allocation3], 1
    %1139 = vsyncpa [#allocation6], 1
    %1140 = vsyncpa [#allocation9], 1
    %1141 = vsyncpa [#allocation12], 1
    %1142 = vsyncpa [#allocation4], 1

</llo_original>
